<compile_context>
chip_gen: v7x
topology: tpu7x:2x2x1
jax: 0.10.0
libtpu: 0.0.40
codegen_flags: <defaults>
</compile_context>

<pallas_src>
import jax
import jax.numpy as jnp
from jax.experimental import pallas as pl
from jax.experimental.pallas import tpu as pltpu


def _lstm_cell_kernel(x_ref, h_ref, c_ref, wx_ref, wh_ref, b_ref,
                      h_out_ref, c_out_ref):
    # gates = x @ Wx + h @ Wh + b   -> (tm, 4N), f32 accumulation on the MXU.
    gates = (jnp.dot(x_ref[...], wx_ref[...],
                     preferred_element_type=jnp.float32)
             + jnp.dot(h_ref[...], wh_ref[...],
                       preferred_element_type=jnp.float32)
             + b_ref[...].astype(jnp.float32))

    n = c_ref.shape[-1]
    i = gates[:, 0 * n:1 * n]
    j = gates[:, 1 * n:2 * n]
    f = gates[:, 2 * n:3 * n]          # TF +1.0 forget bias pre-folded into b
    o = gates[:, 3 * n:4 * n]

    c_prev = c_ref[...].astype(jnp.float32)
    c_t = c_prev * jax.nn.sigmoid(f) + jax.nn.sigmoid(i) * jnp.tanh(j)
    h_t = jnp.tanh(c_t) * jax.nn.sigmoid(o)

    c_out_ref[...] = c_t.astype(c_out_ref.dtype)
    h_out_ref[...] = h_t.astype(h_out_ref.dtype)


def tf_lstm_cell(x_t, state, weight, bias, *, block_b=None, compute_dtype=None):
    """Pallas equivalent of TFLSTMCell.forward. Returns (h_t, c_t).

    weight: [n_inputs + n_units, 4*n_units], bias: [4*n_units].
    block_b: batch tile; default auto (B if B<=256 else 256).
    compute_dtype: optionally cast x/h/W (e.g. bf16) for the MXU dots;
    accumulation, gate math and c_t stay f32.
    """
    h_tm1, c_tm1 = state
    B, n_inputs = x_t.shape
    N = h_tm1.shape[1]
    assert weight.shape == (n_inputs + N, 4 * N)
    h_dtype = h_tm1.dtype

    # ---- batch tile selection (fills the MXU; no host-side padding) -------
    if block_b is None:
        tm = B if B <= 256 else 256
    else:
        tm = min(block_b, B)
    num_tiles = pl.cdiv(B, tm)
    if num_tiles > 1:
        # (8,128) rule: a tiled batch block needs a sublane-multiple row count.
        assert tm % 8 == 0, "block_b must be a multiple of 8 when tiling"

    # ---- split weights; fold forget-gate +1.0 into the bias f-block -------
    w_x = weight[:n_inputs, :]
    w_h = weight[n_inputs:, :]
    bias2d = (bias.astype(jnp.float32)
              .at[2 * N:3 * N].add(1.0)
              .reshape(1, 4 * N))

    x_in, h_in = x_t, h_tm1
    if compute_dtype is not None:
        x_in = x_in.astype(compute_dtype)
        h_in = h_in.astype(compute_dtype)
        w_x = w_x.astype(compute_dtype)
        w_h = w_h.astype(compute_dtype)
    act_itemsize = x_in.dtype.itemsize

    # ---- weight residency: single-buffer constant-index weights when big --
    w_bytes = (w_x.size * w_x.dtype.itemsize + w_h.size * w_h.dtype.itemsize)
    weight_pipeline = pl.Buffered(1) if w_bytes > (8 << 20) else None

    def const_spec(shape):
        if weight_pipeline is None:
            return pl.BlockSpec(shape, lambda i: (0, 0))
        return pl.BlockSpec(shape, lambda i: (0, 0),
                            pipeline_mode=weight_pipeline)

    # ---- VMEM budget / compiler params ------------------------------------
    n_wbuf = 1 if weight_pipeline is not None else 2
    vmem_est = (n_wbuf * (w_bytes + bias2d.size * 4)
                + 2 * tm * (n_inputs + N) * act_itemsize      # x,h (dbl buf)
                + 2 * tm * N * c_tm1.dtype.itemsize           # c   (dbl buf)
                + 2 * tm * N * (jnp.dtype(h_dtype).itemsize + 4)   # outputs
                + 2 * tm * 4 * N * 4)                          # gates slab
    cp_kwargs = dict(
        dimension_semantics=(("parallel",) if num_tiles > 1
                             else ("arbitrary",)))
    if vmem_est > (16 << 20):   # above the smallest (v5e) scoped default
        cp_kwargs["vmem_limit_bytes"] = int(min(vmem_est * 3 // 2, 64 << 20))
    compiler_params = pltpu.CompilerParams(**cp_kwargs)

    flops = 2 * B * (n_inputs + N) * 4 * N
    transcendentals = 5 * B * N
    bytes_accessed = sum(int(a.size) * a.dtype.itemsize
                         for a in (x_in, h_in, c_tm1, w_x, w_h, bias2d))
    bytes_accessed += B * N * (jnp.dtype(h_dtype).itemsize + 4)

    h_t, c_t = pl.pallas_call(
        _lstm_cell_kernel,
        out_shape=(jax.ShapeDtypeStruct((B, N), h_dtype),        # h_t
                   jax.ShapeDtypeStruct((B, N), jnp.float32)),   # c_t (f32)
        grid=(num_tiles,),
        in_specs=[
            pl.BlockSpec((tm, n_inputs), lambda i: (i, 0)),      # x tile
            pl.BlockSpec((tm, N), lambda i: (i, 0)),             # h tile
            pl.BlockSpec((tm, N), lambda i: (i, 0)),             # c tile
            const_spec((n_inputs, 4 * N)),                       # W_x resident
            const_spec((N, 4 * N)),                              # W_h resident
            const_spec((1, 4 * N)),                              # bias resident
        ],
        out_specs=(
            pl.BlockSpec((tm, N), lambda i: (i, 0)),             # h_t
            pl.BlockSpec((tm, N), lambda i: (i, 0)),             # c_t
        ),
        compiler_params=compiler_params,
        cost_estimate=pl.CostEstimate(flops=flops,
                                      transcendentals=transcendentals,
                                      bytes_accessed=bytes_accessed),
    )(x_in, h_in, c_tm1, w_x, w_h, bias2d)
    # Ragged final batch tile: out-of-bounds rows are never written back and
    # garbage in out-of-bounds input rows cannot reach valid rows (purely
    # row-local math), so no padding/slicing is needed.
    return h_t, c_t


def init_params(key, n_inputs, n_units):
    """Deterministic synthetic init matching the module's shapes.

    NOTE: in the PyTorch __init__, wi/wj/wf/wo alias the SAME tensor, so all
    four concatenated gate blocks end up identical; reproduced by tiling a
    single kaiming-uniform block 4x along dim 1.
    """
    K = n_units + n_inputs
    bound = jnp.sqrt(6.0 / n_units)            # kaiming_uniform_, fan_in=n_units
    w_block = jax.random.uniform(key, (K, n_units), jnp.float32,
                                 minval=-bound, maxval=bound)
    weight = jnp.tile(w_block, (1, 4))          # (K, 4*n_units)
    bias = jnp.zeros((4 * n_units,), jnp.float32)
    return weight, bias


def _reference(x_t, state, weight, bias):
    """Pure-JAX reference (matches the PyTorch forward)."""
    h_tm1, c_tm1 = state
    args = jnp.concatenate([x_t, h_tm1], axis=1)
    out = args @ weight + bias
    n = h_tm1.shape[1]
    i, j, f, o = (out[:, 0:n], out[:, n:2 * n],
                  out[:, 2 * n:3 * n], out[:, 3 * n:4 * n])
    g = jnp.tanh(j)
    c_t = c_tm1 * jax.nn.sigmoid(f + 1.0) + jax.nn.sigmoid(i) * g
    h_t = jnp.tanh(c_t) * jax.nn.sigmoid(o)
    return h_t, c_t


if __name__ == "__main__":
    n_inputs = 4
    n_units = 128     # module default -> lane-dense gate slices and outputs

    key = jax.random.PRNGKey(0)
    kw, kx, kh, kc = jax.random.split(key, 4)
    weight, bias = init_params(kw, n_inputs, n_units)

    # ---- check 1: f32, auto tile (single batch tile, grid=(1,)) ----------
    B = 16
    x_t = jax.random.normal(kx, (B, n_inputs), jnp.float32)
    h_tm1 = jax.random.normal(kh, (B, n_units), jnp.float32)
    c_tm1 = jax.random.normal(kc, (B, n_units), jnp.float32)
    h_ref, c_ref = _reference(x_t, (h_tm1, c_tm1), weight, bias)

    h_t, c_t = tf_lstm_cell(x_t, (h_tm1, c_tm1), weight, bias)
    jax.block_until_ready((h_t, c_t))
    assert h_t.shape == h_ref.shape and c_t.shape == c_ref.shape
    assert jnp.allclose(h_t, h_ref, atol=1e-5, rtol=1e-5)
    assert jnp.allclose(c_t, c_ref, atol=1e-5, rtol=1e-5)

    # ---- check 2: ragged multi-tile batch, no host-side padding ----------
    B2 = 20
    x2 = jax.random.normal(kx, (B2, n_inputs), jnp.float32)
    h2 = jax.random.normal(kh, (B2, n_units), jnp.float32)
    c2 = jax.random.normal(kc, (B2, n_units), jnp.float32)
    h2_ref, c2_ref = _reference(x2, (h2, c2), weight, bias)

    h2_t, c2_t = tf_lstm_cell(x2, (h2, c2), weight, bias, block_b=16)
    jax.block_until_ready((h2_t, c2_t))
    assert h2_t.shape == h2_ref.shape and c2_t.shape == c2_ref.shape
    assert jnp.allclose(h2_t, h2_ref, atol=1e-5, rtol=1e-5)
    assert jnp.allclose(c2_t, c2_ref, atol=1e-5, rtol=1e-5)

    # ---- check 3: bf16 MXU inputs, f32 accumulation (production config) --
    h3_t, c3_t = tf_lstm_cell(x_t, (h_tm1, c_tm1), weight, bias,
                              compute_dtype=jnp.bfloat16)
    jax.block_until_ready((h3_t, c3_t))
    assert jnp.allclose(h3_t, h_ref, atol=3e-2, rtol=3e-2)
    assert jnp.allclose(c3_t, c_ref, atol=3e-2, rtol=3e-2)

    print("KERNEL_OK")
</pallas_src>

<mosaic_0001>
module attributes {stable_mosaic.version = 11 : i64} {
  func.func @_lstm_cell_kernel(%arg0: i32, %arg1: memref<16x4xf32, #tpu.memory_space<vmem>>, %arg2: memref<16x128xf32, #tpu.memory_space<vmem>>, %arg3: memref<16x128xf32, #tpu.memory_space<vmem>>, %arg4: memref<4x512xf32, #tpu.memory_space<vmem>>, %arg5: memref<128x512xf32, #tpu.memory_space<vmem>>, %arg6: memref<1x512xf32, #tpu.memory_space<vmem>>, %arg7: memref<16x128xf32, #tpu.memory_space<vmem>>, %arg8: memref<16x128xf32, #tpu.memory_space<vmem>>) attributes {dimension_semantics = [#tpu.dimension_semantics<arbitrary>], iteration_bounds = array<i64: 1>, scalar_prefetch = 0 : i64, scratch_operands = 0 : i64, tpu.core_type = #tpu.core_type<tc>, window_params = [{transform_indices = @transform_0, window_bounds = array<i64: 16, 4>}, {transform_indices = @transform_1, window_bounds = array<i64: 16, 128>}, {transform_indices = @transform_2, window_bounds = array<i64: 16, 128>}, {pipeline_mode = #tpu.pipeline_mode<synchronous>, transform_indices = @transform_3, window_bounds = array<i64: 4, 512>}, {pipeline_mode = #tpu.pipeline_mode<synchronous>, transform_indices = @transform_4, window_bounds = array<i64: 128, 512>}, {pipeline_mode = #tpu.pipeline_mode<synchronous>, transform_indices = @transform_5, window_bounds = array<i64: 1, 512>}, {transform_indices = @transform_6, window_bounds = array<i64: 16, 128>}, {transform_indices = @transform_7, window_bounds = array<i64: 16, 128>}]} {
    %c0 = arith.constant 0 : index
    %c0_0 = arith.constant 0 : index
    %0 = vector.load %arg1[%c0, %c0_0] : memref<16x4xf32, #tpu.memory_space<vmem>>, vector<16x4xf32>
    %c0_1 = arith.constant 0 : index
    %c0_2 = arith.constant 0 : index
    %1 = vector.load %arg4[%c0_1, %c0_2] : memref<4x512xf32, #tpu.memory_space<vmem>>, vector<4x512xf32>
    %cst = arith.constant dense<0.000000e+00> : vector<16x512xf32>
    %2 = tpu.matmul %0, %1, %cst {dimension_numbers = #tpu.dot_dimension_numbers<[1], [0], [0], [1], [0, 0, 1, 1], [], []>} : vector<16x4xf32>, vector<4x512xf32>, vector<16x512xf32> -> vector<16x512xf32>
    %c0_3 = arith.constant 0 : index
    %c0_4 = arith.constant 0 : index
    %3 = vector.load %arg2[%c0_3, %c0_4] : memref<16x128xf32, #tpu.memory_space<vmem>>, vector<16x128xf32>
    %c0_5 = arith.constant 0 : index
    %c0_6 = arith.constant 0 : index
    %4 = vector.load %arg5[%c0_5, %c0_6] : memref<128x512xf32, #tpu.memory_space<vmem>>, vector<128x512xf32>
    %cst_7 = arith.constant dense<0.000000e+00> : vector<16x512xf32>
    %5 = tpu.matmul %3, %4, %cst_7 {dimension_numbers = #tpu.dot_dimension_numbers<[1], [0], [0], [1], [0, 0, 1, 1], [], []>} : vector<16x128xf32>, vector<128x512xf32>, vector<16x512xf32> -> vector<16x512xf32>
    %6 = arith.addf %2, %5 : vector<16x512xf32>
    %c0_8 = arith.constant 0 : index
    %c0_9 = arith.constant 0 : index
    %7 = vector.load %arg6[%c0_8, %c0_9] : memref<1x512xf32, #tpu.memory_space<vmem>>, vector<1x512xf32>
    %8 = vector.broadcast %7 : vector<1x512xf32> to vector<16x512xf32>
    %9 = arith.addf %6, %8 : vector<16x512xf32>
    %10 = vector.extract_strided_slice %9 {offsets = [0, 0], sizes = [16, 128], strides = [1, 1]} : vector<16x512xf32> to vector<16x128xf32>
    %11 = vector.extract_strided_slice %9 {offsets = [0, 128], sizes = [16, 128], strides = [1, 1]} : vector<16x512xf32> to vector<16x128xf32>
    %12 = vector.extract_strided_slice %9 {offsets = [0, 256], sizes = [16, 128], strides = [1, 1]} : vector<16x512xf32> to vector<16x128xf32>
    %13 = vector.extract_strided_slice %9 {offsets = [0, 384], sizes = [16, 128], strides = [1, 1]} : vector<16x512xf32> to vector<16x128xf32>
    %c0_10 = arith.constant 0 : index
    %c0_11 = arith.constant 0 : index
    %14 = vector.load %arg3[%c0_10, %c0_11] : memref<16x128xf32, #tpu.memory_space<vmem>>, vector<16x128xf32>
    %15 = arith.negf %12 : vector<16x128xf32>
    %16 = math.exp %15 : vector<16x128xf32>
    %cst_12 = arith.constant 1.000000e+00 : f32
    %17 = vector.broadcast %cst_12 : f32 to vector<16x128xf32>
    %18 = arith.addf %17, %16 : vector<16x128xf32>
    %19 = arith.divf %17, %18 : vector<16x128xf32>
    %20 = arith.mulf %14, %19 : vector<16x128xf32>
    %21 = arith.negf %10 : vector<16x128xf32>
    %22 = math.exp %21 : vector<16x128xf32>
    %cst_13 = arith.constant 1.000000e+00 : f32
    %23 = vector.broadcast %cst_13 : f32 to vector<16x128xf32>
    %24 = arith.addf %23, %22 : vector<16x128xf32>
    %25 = arith.divf %23, %24 : vector<16x128xf32>
    %26 = math.tanh %11 : vector<16x128xf32>
    %27 = arith.mulf %25, %26 : vector<16x128xf32>
    %28 = arith.addf %20, %27 : vector<16x128xf32>
    %29 = math.tanh %28 : vector<16x128xf32>
    %30 = arith.negf %13 : vector<16x128xf32>
    %31 = math.exp %30 : vector<16x128xf32>
    %cst_14 = arith.constant 1.000000e+00 : f32
    %32 = vector.broadcast %cst_14 : f32 to vector<16x128xf32>
    %33 = arith.addf %32, %31 : vector<16x128xf32>
    %34 = arith.divf %32, %33 : vector<16x128xf32>
    %35 = arith.mulf %29, %34 : vector<16x128xf32>
    %c0_15 = arith.constant 0 : index
    %c0_16 = arith.constant 0 : index
    %36 = vector.load %arg8[%c0_15, %c0_16] : memref<16x128xf32, #tpu.memory_space<vmem>>, vector<16x128xf32>
    tpu.vector_store %arg8[%c0_15, %c0_16], %28 {strides = array<i32>} : memref<16x128xf32, #tpu.memory_space<vmem>>, vector<16x128xf32>,
    %c0_17 = arith.constant 0 : index
    %c0_18 = arith.constant 0 : index
    %37 = vector.load %arg7[%c0_17, %c0_18] : memref<16x128xf32, #tpu.memory_space<vmem>>, vector<16x128xf32>
    tpu.vector_store %arg7[%c0_17, %c0_18], %35 {strides = array<i32>} : memref<16x128xf32, #tpu.memory_space<vmem>>, vector<16x128xf32>,
    return
  }
  func.func @transform_0(%arg0: i32) -> (i32, i32) {
    %c0_i32 = arith.constant 0 : i32
    %c0_i32_0 = arith.constant 0 : i32
    return %arg0, %c0_i32 : i32, i32
  }
  func.func @transform_1(%arg0: i32) -> (i32, i32) {
    %c0_i32 = arith.constant 0 : i32
    %c0_i32_0 = arith.constant 0 : i32
    return %arg0, %c0_i32 : i32, i32
  }
  func.func @transform_2(%arg0: i32) -> (i32, i32) {
    %c0_i32 = arith.constant 0 : i32
    %c0_i32_0 = arith.constant 0 : i32
    return %arg0, %c0_i32 : i32, i32
  }
  func.func @transform_3(%arg0: i32) -> (i32, i32) {
    %c0_i32 = arith.constant 0 : i32
    %c0_i32_0 = arith.constant 0 : i32
    %c0_i32_1 = arith.constant 0 : i32
    return %c0_i32, %c0_i32_0 : i32, i32
  }
  func.func @transform_4(%arg0: i32) -> (i32, i32) {
    %c0_i32 = arith.constant 0 : i32
    %c0_i32_0 = arith.constant 0 : i32
    %c0_i32_1 = arith.constant 0 : i32
    return %c0_i32, %c0_i32_0 : i32, i32
  }
  func.func @transform_5(%arg0: i32) -> (i32, i32) {
    %c0_i32 = arith.constant 0 : i32
    %c0_i32_0 = arith.constant 0 : i32
    %c0_i32_1 = arith.constant 0 : i32
    return %c0_i32, %c0_i32_0 : i32, i32
  }
  func.func @transform_6(%arg0: i32) -> (i32, i32) {
    %c0_i32 = arith.constant 0 : i32
    %c0_i32_0 = arith.constant 0 : i32
    return %arg0, %c0_i32 : i32, i32
  }
  func.func @transform_7(%arg0: i32) -> (i32, i32) {
    %c0_i32 = arith.constant 0 : i32
    %c0_i32_0 = arith.constant 0 : i32
    return %arg0, %c0_i32 : i32, i32
  }
}

</mosaic_0001>

<llo_original>
// kernel: tpu_custom_call.1
$region0: #{tpu_custom_call.1}
  #allocation0 [shape = 'u32[]', space=smem, size = 0x4, offset = 0x4, fixed_abs, tag = 'smem constant byte address 0x4 - core index']
  #allocation1 [shape = 'u32[144,128]{1,0:T(1,128)}', space=vmem, size = 0x12000, scoped, tag = 'internal scratch']
  %s0 = inlined_call_operand.vmem [shape: f32[16,4], index: 0, kind: input, shape index: {}]
  %s1 = inlined_call_operand.vmem [shape: f32[16,128], index: 1, kind: input, shape index: {}]
  %s2 = inlined_call_operand.hbm [shape: f32[16,128], index: 2, kind: input, shape index: {}]
  %s3 = inlined_call_operand.hbm [shape: f32[4,512], index: 3, kind: input, shape index: {}]
  %s4 = inlined_call_operand.hbm [shape: f32[128,512], index: 4, kind: input, shape index: {}]
  %s5 = inlined_call_operand.vmem [shape: f32[1,512], index: 5, kind: input, shape index: {}]
  %s6 = inlined_call_operand.hbm [shape: f32[16,128], index: 6, kind: output, shape index: {0}]
  %s7 = inlined_call_operand.hbm [shape: f32[16,128], index: 7, kind: output, shape index: {1}]
  %8 = xla_tuple %s6, %s7
  %s9 = sld [smem:[#allocation0]]
  $region54: #{tpu_custom_call.1} parent=0
    _
  %s11 = ssub.s32 1, %s9
  %s12 = scalar_select 0, %s11, %s9
  $region1: #{tpu_custom_call.1} parent=0
    #allocation2 [shape = 'u8[8192]{0}', space=vmem, size = 0x2000, scoped, tag = 'input window, operand 2, single buffered']
    #allocation3 [shape = 's32[1]{0}', space=sflag, size = 0x4, scoped, tag = 'scoped memory for tpu_custom_call.1']
    #allocation4 [shape = 's32[1]{0}', space=sflag, size = 0x4, scoped, tag = 'scoped memory for tpu_custom_call.1']
    #allocation5 [shape = 'u8[8192]{0}', space=vmem, size = 0x2000, scoped, tag = 'input window, operand 3, single buffered']
    #allocation6 [shape = 's32[1]{0}', space=sflag, size = 0x4, scoped, tag = 'scoped memory for tpu_custom_call.1']
    #allocation7 [shape = 'u8[262144]{0}', space=vmem, size = 0x40000, scoped, tag = 'input window, operand 4, single buffered']
    #allocation8 [shape = 'u8[8192]{0}', space=vmem, size = 0x2000, scoped, tag = 'output window, operand 0, single buffered']
    #allocation9 [shape = 'u8[8192]{0}', space=vmem, size = 0x2000, scoped, tag = 'output window, operand 1, single buffered']
    #allocation10 [shape = 's32[1]{0}', space=sflag, size = 0x4, scoped, tag = 'scoped memory for tpu_custom_call.1']
    %13 = vsyncpa [#allocation3], 0
    %14 = vsyncpa [#allocation6], 0
    %15 = vsyncpa [#allocation4], 0
    %16 = vsyncpa [#allocation10], 0
    // Predicated region
    $region2: #{tpu_custom_call.1} parent=1 // pred_check
      _
    $region3: #{tpu_custom_call.1} parent=1 // pred_check_branch
      %18 = sbr.rel (0) target = $region5
    $region4: #{tpu_custom_call.1} parent=1 // pred_region
      _
    $region5: #{tpu_custom_call.1} parent=1 // pred_fallthru
      _
    // Predicated region
    $region6: #{tpu_custom_call.1} parent=1 // pred_check
      _
    $region7: #{tpu_custom_call.1} parent=1 // pred_check_branch
      %20 = sbr.rel (0) target = $region9
    $region8: #{tpu_custom_call.1} parent=1 // pred_region
      _
    $region9: #{tpu_custom_call.1} parent=1 // pred_fallthru
      _
    // Predicated region
    $region10: #{tpu_custom_call.1} parent=1 // pred_check
      _
    $region11: #{tpu_custom_call.1} parent=1 // pred_check_branch
      %22 = sbr.rel (0) target = $region13
    $region12: #{tpu_custom_call.1} parent=1 // pred_region
      %s24 = ssub.s32 256, 256
      %25 = vsyncadd [#allocation3], %s24
      %s26 = sshll.u32 [#allocation2], 4
      %s27 = int_to_ptr.vmem [resolvable:$true] %s26
      %32 = dma.hbm_to_vmem [thread:$0]  %s2, 256, %s27, [#allocation3], 128, 128, 8
    $region13: #{tpu_custom_call.1} parent=1 // pred_fallthru
      _
    // Predicated region
    $region14: #{tpu_custom_call.1} parent=1 // pred_check
      _
    $region15: #{tpu_custom_call.1} parent=1 // pred_check_branch
      %34 = sbr.rel (0) target = $region17
    $region16: #{tpu_custom_call.1} parent=1 // pred_region
      %s36 = ssub.s32 256, 256
      %37 = vsyncadd [#allocation6], %s36
      %s39 = sshll.u32 [#allocation5], 4
      %s40 = int_to_ptr.vmem [resolvable:$true] %s39
      %42 = dma.hbm_to_vmem [thread:$0]  %s3, 256, %s40, [#allocation6]
    $region17: #{tpu_custom_call.1} parent=1 // pred_fallthru
      _
    // Predicated region
    $region18: #{tpu_custom_call.1} parent=1 // pred_check
      _
    $region19: #{tpu_custom_call.1} parent=1 // pred_check_branch
      %44 = sbr.rel (0) target = $region21
    $region20: #{tpu_custom_call.1} parent=1 // pred_region
      %s46 = ssub.s32 8192, 8192
      %47 = vsyncadd [#allocation6], %s46
      %s48 = sshll.u32 [#allocation7], 4
      %s49 = int_to_ptr.vmem [resolvable:$true] %s48
      %54 = dma.hbm_to_vmem [thread:$0]  %s4, 8192, %s49, [#allocation6], 512, 512, 32
    $region21: #{tpu_custom_call.1} parent=1 // pred_fallthru
      _
    // Predicated region
    $region22: #{tpu_custom_call.1} parent=1 // pred_check
      _
    $region23: #{tpu_custom_call.1} parent=1 // pred_check_branch
      %56 = sbr.rel (0) target = $region25
    $region24: #{tpu_custom_call.1} parent=1 // pred_region
      _
    $region25: #{tpu_custom_call.1} parent=1 // pred_fallthru
      _
    // Predicated region
    $region26: #{tpu_custom_call.1} parent=1 // pred_check
      _
    $region27: #{tpu_custom_call.1} parent=1 // pred_check_branch
      %58 = sbr.rel (0) target = $region29
    $region28: #{tpu_custom_call.1} parent=1 // pred_region
      %59 = dma.done [#allocation3], 256
    $region29: #{tpu_custom_call.1} parent=1 // pred_fallthru
      _
    // Predicated region
    $region30: #{tpu_custom_call.1} parent=1 // pred_check
      _
    $region31: #{tpu_custom_call.1} parent=1 // pred_check_branch
      %61 = sbr.rel (0) target = $region33
    $region32: #{tpu_custom_call.1} parent=1 // pred_region
      %62 = dma.done [#allocation6], 256
    $region33: #{tpu_custom_call.1} parent=1 // pred_fallthru
      _
    // Predicated region
    $region34: #{tpu_custom_call.1} parent=1 // pred_check
      _
    $region35: #{tpu_custom_call.1} parent=1 // pred_check_branch
      %64 = sbr.rel (0) target = $region37
    $region36: #{tpu_custom_call.1} parent=1 // pred_region
      %65 = dma.done [#allocation6], 8192
    $region37: #{tpu_custom_call.1} parent=1 // pred_fallthru
      _
    %v66 = vld [vmem:[%s0] sm:$0xff]
    %v67 = vld [vmem:[%s0 + $0x8] sm:$0xff]
    %v68 = vld [vmem:[#allocation5] sm:$0xff]
    %v69 = vld [vmem:[#allocation5 + $0x8] sm:$0xff]
    %v70 = vld [vmem:[%s1] sm:$0xff]
    %v71 = vld [vmem:[%s1 + $0x8] sm:$0xff]
    %v72 = vld [vmem:[#allocation7] sm:$0xff]
    %v73 = vld [vmem:[#allocation7 + $0x8] sm:$0xff]
    %v74 = vld [vmem:[#allocation7 + $0x10] sm:$0xff]
    %v75 = vld [vmem:[#allocation7 + $0x18] sm:$0xff]
    %v76 = vld [vmem:[#allocation7 + $0x20] sm:$0xff]
    %v77 = vld [vmem:[#allocation7 + $0x28] sm:$0xff]
    %v78 = vld [vmem:[#allocation7 + $0x30] sm:$0xff]
    %v79 = vld [vmem:[#allocation7 + $0x38] sm:$0xff]
    %v80 = vld [vmem:[#allocation7 + $0x40] sm:$0xff]
    %v81 = vld [vmem:[#allocation7 + $0x48] sm:$0xff]
    %v82 = vld [vmem:[#allocation7 + $0x50] sm:$0xff]
    %v83 = vld [vmem:[#allocation7 + $0x58] sm:$0xff]
    %v84 = vld [vmem:[#allocation7 + $0x60] sm:$0xff]
    %v85 = vld [vmem:[#allocation7 + $0x68] sm:$0xff]
    %v86 = vld [vmem:[#allocation7 + $0x70] sm:$0xff]
    %v87 = vld [vmem:[#allocation7 + $0x78] sm:$0xff]
    %v88 = vld [vmem:[#allocation7 + $0x80] sm:$0xff]
    %v89 = vld [vmem:[#allocation7 + $0x88] sm:$0xff]
    %v90 = vld [vmem:[#allocation7 + $0x90] sm:$0xff]
    %v91 = vld [vmem:[#allocation7 + $0x98] sm:$0xff]
    %v92 = vld [vmem:[#allocation7 + $0xa0] sm:$0xff]
    %v93 = vld [vmem:[#allocation7 + $0xa8] sm:$0xff]
    %v94 = vld [vmem:[#allocation7 + $0xb0] sm:$0xff]
    %v95 = vld [vmem:[#allocation7 + $0xb8] sm:$0xff]
    %v96 = vld [vmem:[#allocation7 + $0xc0] sm:$0xff]
    %v97 = vld [vmem:[#allocation7 + $0xc8] sm:$0xff]
    %v98 = vld [vmem:[#allocation7 + $0xd0] sm:$0xff]
    %v99 = vld [vmem:[#allocation7 + $0xd8] sm:$0xff]
    %v100 = vld [vmem:[#allocation7 + $0xe0] sm:$0xff]
    %v101 = vld [vmem:[#allocation7 + $0xe8] sm:$0xff]
    %v102 = vld [vmem:[#allocation7 + $0xf0] sm:$0xff]
    %v103 = vld [vmem:[#allocation7 + $0xf8] sm:$0xff]
    %v104 = vld [vmem:[#allocation7 + $0x100] sm:$0xff]
    %v105 = vld [vmem:[#allocation7 + $0x108] sm:$0xff]
    %v106 = vld [vmem:[#allocation7 + $0x110] sm:$0xff]
    %v107 = vld [vmem:[#allocation7 + $0x118] sm:$0xff]
    %v108 = vld [vmem:[#allocation7 + $0x120] sm:$0xff]
    %v109 = vld [vmem:[#allocation7 + $0x128] sm:$0xff]
    %v110 = vld [vmem:[#allocation7 + $0x130] sm:$0xff]
    %v111 = vld [vmem:[#allocation7 + $0x138] sm:$0xff]
    %v112 = vld [vmem:[#allocation7 + $0x140] sm:$0xff]
    %v113 = vld [vmem:[#allocation7 + $0x148] sm:$0xff]
    %v114 = vld [vmem:[#allocation7 + $0x150] sm:$0xff]
    %v115 = vld [vmem:[#allocation7 + $0x158] sm:$0xff]
    %v116 = vld [vmem:[#allocation7 + $0x160] sm:$0xff]
    %v117 = vld [vmem:[#allocation7 + $0x168] sm:$0xff]
    %v118 = vld [vmem:[#allocation7 + $0x170] sm:$0xff]
    %v119 = vld [vmem:[#allocation7 + $0x178] sm:$0xff]
    %v120 = vld [vmem:[#allocation7 + $0x180] sm:$0xff]
    %v121 = vld [vmem:[#allocation7 + $0x188] sm:$0xff]
    %v122 = vld [vmem:[#allocation7 + $0x190] sm:$0xff]
    %v123 = vld [vmem:[#allocation7 + $0x198] sm:$0xff]
    %v124 = vld [vmem:[#allocation7 + $0x1a0] sm:$0xff]
    %v125 = vld [vmem:[#allocation7 + $0x1a8] sm:$0xff]
    %v126 = vld [vmem:[#allocation7 + $0x1b0] sm:$0xff]
    %v127 = vld [vmem:[#allocation7 + $0x1b8] sm:$0xff]
    %v128 = vld [vmem:[#allocation7 + $0x1c0] sm:$0xff]
    %v129 = vld [vmem:[#allocation7 + $0x1c8] sm:$0xff]
    %v130 = vld [vmem:[#allocation7 + $0x1d0] sm:$0xff]
    %v131 = vld [vmem:[#allocation7 + $0x1d8] sm:$0xff]
    %v132 = vld [vmem:[#allocation7 + $0x1e0] sm:$0xff]
    %v133 = vld [vmem:[#allocation7 + $0x1e8] sm:$0xff]
    %v134 = vld [vmem:[#allocation7 + $0x1f0] sm:$0xff]
    %v135 = vld [vmem:[#allocation7 + $0x1f8] sm:$0xff]
    %136 = vmatprep.subr.mxu0 %v73
    %137 = vmatpush1.msra.mxu0 %v72
    %138 = vmatprep.subr.mxu0 %v77
    %139 = vmatpush1.msra.mxu0 %v76
    %140 = vmatprep.subr.mxu0 %v81
    %141 = vmatpush1.msra.mxu0 %v80
    %142 = vmatprep.subr.mxu0 %v85
    %143 = vmatpush1.msra.mxu0 %v84
    %144 = vmatprep.subr.mxu0 %v89
    %145 = vmatpush1.msra.mxu0 %v88
    %146 = vmatprep.subr.mxu0 %v93
    %147 = vmatpush1.msra.mxu0 %v92
    %148 = vmatprep.subr.mxu0 %v97
    %149 = vmatpush1.msra.mxu0 %v96
    %150 = vmatprep.subr.mxu0 %v101
    %151 = vmatpush1.msra.mxu0 %v100
    %152 = vmatprep.subr.mxu0 %v105
    %153 = vmatpush1.msra.mxu0 %v104
    %154 = vmatprep.subr.mxu0 %v109
    %155 = vmatpush1.msra.mxu0 %v108
    %156 = vmatprep.subr.mxu0 %v113
    %157 = vmatpush1.msra.mxu0 %v112
    %158 = vmatprep.subr.mxu0 %v117
    %159 = vmatpush1.msra.mxu0 %v116
    %160 = vmatprep.subr.mxu0 %v121
    %161 = vmatpush1.msra.mxu0 %v120
    %162 = vmatprep.subr.mxu0 %v125
    %163 = vmatpush1.msra.mxu0 %v124
    %164 = vmatprep.subr.mxu0 %v129
    %165 = vmatpush1.msra.mxu0 %v128
    %166 = vmatprep.subr.mxu0 %v133
    %167 = vmatpush1.msra.mxu0 %v132
    %168 = vmatprep.subr.mxu0 0.0
    %169 = vmatpush1.msra.mxu0 0.0
    %170 = vmatprep.subr.mxu0 0.0
    %171 = vmatpush1.msra.mxu0 0.0
    %172 = vmatprep.subr.mxu0 0.0
    %173 = vmatpush1.msra.mxu0 0.0
    %174 = vmatprep.subr.mxu0 0.0
    %175 = vmatpush1.msra.mxu0 0.0
    %176 = vmatprep.subr.mxu0 0.0
    %177 = vmatpush1.msra.mxu0 0.0
    %178 = vmatprep.subr.mxu0 0.0
    %179 = vmatpush1.msra.mxu0 0.0
    %180 = vmatprep.subr.mxu0 0.0
    %181 = vmatpush1.msra.mxu0 0.0
    %182 = vmatprep.subr.mxu0 0.0
    %183 = vmatpush1.msra.mxu0 0.0
    %184 = vmatprep.subr.mxu0 0.0
    %185 = vmatpush1.msra.mxu0 0.0
    %186 = vmatprep.subr.mxu0 0.0
    %187 = vmatpush1.msra.mxu0 0.0
    %188 = vmatprep.subr.mxu0 0.0
    %189 = vmatpush1.msra.mxu0 0.0
    %190 = vmatprep.subr.mxu0 0.0
    %191 = vmatpush1.msra.mxu0 0.0
    %192 = vmatprep.subr.mxu0 0.0
    %193 = vmatpush1.msra.mxu0 0.0
    %194 = vmatprep.subr.mxu0 0.0
    %195 = vmatpush1.msra.mxu0 0.0
    %196 = vmatprep.subr.mxu0 0.0
    %197 = vmatpush1.msra.mxu0 0.0
    %198 = vmatprep.subr.mxu0 0.0
    %199 = vmatpush1.msra.mxu0 0.0
    %200 = vmatprep.mubr.f32.mxu0 0.0
    %201 = vmatmul.mubr.f32.gmra.mrb[0].mxu0 %v70
    %v202 = vpop.f32.mrb[0].mxu0
    %v203 = vadd.f32 0.0, %v202
    %v204 = vpop.f32.mrb[0].mxu0
    %v205 = vadd.f32 0.0, %v204
    %206 = vmatprep.mubr.f32.mxu0 0.0
    %207 = vmatmul.mubr.f32.gmra.mrb[0].mxu0 %v71
    %v208 = vpop.f32.mrb[0].mxu0
    %v209 = vadd.f32 0.0, %v208
    %v210 = vpop.f32.mrb[0].mxu0
    %v211 = vadd.f32 0.0, %v210
    %212 = vdwg.mxu0
    %213 = vmatprep.subr.mxu0 %v75
    %214 = vmatpush1.msra.mxu0 %v74
    %215 = vmatprep.subr.mxu0 %v79
    %216 = vmatpush1.msra.mxu0 %v78
    %217 = vmatprep.subr.mxu0 %v83
    %218 = vmatpush1.msra.mxu0 %v82
    %219 = vmatprep.subr.mxu0 %v87
    %220 = vmatpush1.msra.mxu0 %v86
    %221 = vmatprep.subr.mxu0 %v91
    %222 = vmatpush1.msra.mxu0 %v90
    %223 = vmatprep.subr.mxu0 %v95
    %224 = vmatpush1.msra.mxu0 %v94
    %225 = vmatprep.subr.mxu0 %v99
    %226 = vmatpush1.msra.mxu0 %v98
    %227 = vmatprep.subr.mxu0 %v103
    %228 = vmatpush1.msra.mxu0 %v102
    %229 = vmatprep.subr.mxu0 %v107
    %230 = vmatpush1.msra.mxu0 %v106
    %231 = vmatprep.subr.mxu0 %v111
    %232 = vmatpush1.msra.mxu0 %v110
    %233 = vmatprep.subr.mxu0 %v115
    %234 = vmatpush1.msra.mxu0 %v114
    %235 = vmatprep.subr.mxu0 %v119
    %236 = vmatpush1.msra.mxu0 %v118
    %237 = vmatprep.subr.mxu0 %v123
    %238 = vmatpush1.msra.mxu0 %v122
    %239 = vmatprep.subr.mxu0 %v127
    %240 = vmatpush1.msra.mxu0 %v126
    %241 = vmatprep.subr.mxu0 %v131
    %242 = vmatpush1.msra.mxu0 %v130
    %243 = vmatprep.subr.mxu0 %v135
    %244 = vmatpush1.msra.mxu0 %v134
    %245 = vmatprep.subr.mxu0 0.0
    %246 = vmatpush1.msra.mxu0 0.0
    %247 = vmatprep.subr.mxu0 0.0
    %248 = vmatpush1.msra.mxu0 0.0
    %249 = vmatprep.subr.mxu0 0.0
    %250 = vmatpush1.msra.mxu0 0.0
    %251 = vmatprep.subr.mxu0 0.0
    %252 = vmatpush1.msra.mxu0 0.0
    %253 = vmatprep.subr.mxu0 0.0
    %254 = vmatpush1.msra.mxu0 0.0
    %255 = vmatprep.subr.mxu0 0.0
    %256 = vmatpush1.msra.mxu0 0.0
    %257 = vmatprep.subr.mxu0 0.0
    %258 = vmatpush1.msra.mxu0 0.0
    %259 = vmatprep.subr.mxu0 0.0
    %260 = vmatpush1.msra.mxu0 0.0
    %261 = vmatprep.subr.mxu0 0.0
    %262 = vmatpush1.msra.mxu0 0.0
    %263 = vmatprep.subr.mxu0 0.0
    %264 = vmatpush1.msra.mxu0 0.0
    %265 = vmatprep.subr.mxu0 0.0
    %266 = vmatpush1.msra.mxu0 0.0
    %267 = vmatprep.subr.mxu0 0.0
    %268 = vmatpush1.msra.mxu0 0.0
    %269 = vmatprep.subr.mxu0 0.0
    %270 = vmatpush1.msra.mxu0 0.0
    %271 = vmatprep.subr.mxu0 0.0
    %272 = vmatpush1.msra.mxu0 0.0
    %273 = vmatprep.subr.mxu0 0.0
    %274 = vmatpush1.msra.mxu0 0.0
    %275 = vmatprep.subr.mxu0 0.0
    %276 = vmatpush1.msra.mxu0 0.0
    %277 = vmatprep.mubr.f32.mxu0 0.0
    %278 = vmatmul.mubr.f32.gmra.mrb[0].mxu0 %v70
    %v279 = vpop.f32.mrb[0].mxu0
    %v280 = vadd.f32 0.0, %v279
    %v281 = vpop.f32.mrb[0].mxu0
    %v282 = vadd.f32 0.0, %v281
    %283 = vmatprep.mubr.f32.mxu0 0.0
    %284 = vmatmul.mubr.f32.gmra.mrb[0].mxu0 %v71
    %v285 = vpop.f32.mrb[0].mxu0
    %v286 = vadd.f32 0.0, %v285
    %v287 = vpop.f32.mrb[0].mxu0
    %v288 = vadd.f32 0.0, %v287
    %289 = vdwg.mxu0
    %v292 = vcombine.high %v68, %v68
    %v293 = vcombine.high %v69, %v69
    %vm294 = vcmask 31744
    %v296 = vsel %vm294, %v66, 0
    %v299 = vsel %vm294, %v67, 0
    %vm301 = vcmask 1043456
    %v302 = vsel %vm301, %v68, 0
    %v304 = vsel %vm301, %v292, 0
    %v306 = vsel %vm301, %v69, 0
    %v308 = vsel %vm301, %v293, 0
    %310 = vmatprep.subr.mxu0 %v304
    %311 = vmatpush1.msra.mxu0 %v302
    %312 = vmatprep.subr.mxu0 0.0
    %313 = vmatpush1.msra.mxu0 0.0
    %314 = vmatprep.subr.mxu0 0.0
    %315 = vmatpush1.msra.mxu0 0.0
    %316 = vmatprep.subr.mxu0 0.0
    %317 = vmatpush1.msra.mxu0 0.0
    %318 = vmatprep.subr.mxu0 0.0
    %319 = vmatpush1.msra.mxu0 0.0
    %320 = vmatprep.subr.mxu0 0.0
    %321 = vmatpush1.msra.mxu0 0.0
    %322 = vmatprep.subr.mxu0 0.0
    %323 = vmatpush1.msra.mxu0 0.0
    %324 = vmatprep.subr.mxu0 0.0
    %325 = vmatpush1.msra.mxu0 0.0
    %326 = vmatprep.subr.mxu0 0.0
    %327 = vmatpush1.msra.mxu0 0.0
    %328 = vmatprep.subr.mxu0 0.0
    %329 = vmatpush1.msra.mxu0 0.0
    %330 = vmatprep.subr.mxu0 0.0
    %331 = vmatpush1.msra.mxu0 0.0
    %332 = vmatprep.subr.mxu0 0.0
    %333 = vmatpush1.msra.mxu0 0.0
    %334 = vmatprep.subr.mxu0 0.0
    %335 = vmatpush1.msra.mxu0 0.0
    %336 = vmatprep.subr.mxu0 0.0
    %337 = vmatpush1.msra.mxu0 0.0
    %338 = vmatprep.subr.mxu0 0.0
    %339 = vmatpush1.msra.mxu0 0.0
    %340 = vmatprep.subr.mxu0 0.0
    %341 = vmatpush1.msra.mxu0 0.0
    %342 = vmatprep.subr.mxu0 0.0
    %343 = vmatpush1.msra.mxu0 0.0
    %344 = vmatprep.subr.mxu0 0.0
    %345 = vmatpush1.msra.mxu0 0.0
    %346 = vmatprep.subr.mxu0 0.0
    %347 = vmatpush1.msra.mxu0 0.0
    %348 = vmatprep.subr.mxu0 0.0
    %349 = vmatpush1.msra.mxu0 0.0
    %350 = vmatprep.subr.mxu0 0.0
    %351 = vmatpush1.msra.mxu0 0.0
    %352 = vmatprep.subr.mxu0 0.0
    %353 = vmatpush1.msra.mxu0 0.0
    %354 = vmatprep.subr.mxu0 0.0
    %355 = vmatpush1.msra.mxu0 0.0
    %356 = vmatprep.subr.mxu0 0.0
    %357 = vmatpush1.msra.mxu0 0.0
    %358 = vmatprep.subr.mxu0 0.0
    %359 = vmatpush1.msra.mxu0 0.0
    %360 = vmatprep.subr.mxu0 0.0
    %361 = vmatpush1.msra.mxu0 0.0
    %362 = vmatprep.subr.mxu0 0.0
    %363 = vmatpush1.msra.mxu0 0.0
    %364 = vmatprep.subr.mxu0 0.0
    %365 = vmatpush1.msra.mxu0 0.0
    %366 = vmatprep.subr.mxu0 0.0
    %367 = vmatpush1.msra.mxu0 0.0
    %368 = vmatprep.subr.mxu0 0.0
    %369 = vmatpush1.msra.mxu0 0.0
    %370 = vmatprep.subr.mxu0 0.0
    %371 = vmatpush1.msra.mxu0 0.0
    %372 = vmatprep.subr.mxu0 0.0
    %373 = vmatpush1.msra.mxu0 0.0
    %374 = vmatprep.mubr.f32.mxu0 0.0
    %375 = vmatmul.mubr.f32.gmra.mrb[0].mxu0 %v296
    %v376 = vpop.f32.mrb[0].mxu0
    %v377 = vadd.f32 %v203, %v376
    %v378 = vpop.f32.mrb[0].mxu0
    %v379 = vadd.f32 %v205, %v378
    %380 = vmatprep.mubr.f32.mxu0 0.0
    %381 = vmatmul.mubr.f32.gmra.mrb[0].mxu0 %v299
    %v382 = vpop.f32.mrb[0].mxu0
    %v383 = vadd.f32 %v209, %v382
    %v384 = vpop.f32.mrb[0].mxu0
    %v385 = vadd.f32 %v211, %v384
    %386 = vdwg.mxu0
    %387 = vmatprep.subr.mxu0 %v308
    %388 = vmatpush1.msra.mxu0 %v306
    %389 = vmatprep.subr.mxu0 0.0
    %390 = vmatpush1.msra.mxu0 0.0
    %391 = vmatprep.subr.mxu0 0.0
    %392 = vmatpush1.msra.mxu0 0.0
    %393 = vmatprep.subr.mxu0 0.0
    %394 = vmatpush1.msra.mxu0 0.0
    %395 = vmatprep.subr.mxu0 0.0
    %396 = vmatpush1.msra.mxu0 0.0
    %397 = vmatprep.subr.mxu0 0.0
    %398 = vmatpush1.msra.mxu0 0.0
    %399 = vmatprep.subr.mxu0 0.0
    %400 = vmatpush1.msra.mxu0 0.0
    %401 = vmatprep.subr.mxu0 0.0
    %402 = vmatpush1.msra.mxu0 0.0
    %403 = vmatprep.subr.mxu0 0.0
    %404 = vmatpush1.msra.mxu0 0.0
    %405 = vmatprep.subr.mxu0 0.0
    %406 = vmatpush1.msra.mxu0 0.0
    %407 = vmatprep.subr.mxu0 0.0
    %408 = vmatpush1.msra.mxu0 0.0
    %409 = vmatprep.subr.mxu0 0.0
    %410 = vmatpush1.msra.mxu0 0.0
    %411 = vmatprep.subr.mxu0 0.0
    %412 = vmatpush1.msra.mxu0 0.0
    %413 = vmatprep.subr.mxu0 0.0
    %414 = vmatpush1.msra.mxu0 0.0
    %415 = vmatprep.subr.mxu0 0.0
    %416 = vmatpush1.msra.mxu0 0.0
    %417 = vmatprep.subr.mxu0 0.0
    %418 = vmatpush1.msra.mxu0 0.0
    %419 = vmatprep.subr.mxu0 0.0
    %420 = vmatpush1.msra.mxu0 0.0
    %421 = vmatprep.subr.mxu0 0.0
    %422 = vmatpush1.msra.mxu0 0.0
    %423 = vmatprep.subr.mxu0 0.0
    %424 = vmatpush1.msra.mxu0 0.0
    %425 = vmatprep.subr.mxu0 0.0
    %426 = vmatpush1.msra.mxu0 0.0
    %427 = vmatprep.subr.mxu0 0.0
    %428 = vmatpush1.msra.mxu0 0.0
    %429 = vmatprep.subr.mxu0 0.0
    %430 = vmatpush1.msra.mxu0 0.0
    %431 = vmatprep.subr.mxu0 0.0
    %432 = vmatpush1.msra.mxu0 0.0
    %433 = vmatprep.subr.mxu0 0.0
    %434 = vmatpush1.msra.mxu0 0.0
    %435 = vmatprep.subr.mxu0 0.0
    %436 = vmatpush1.msra.mxu0 0.0
    %437 = vmatprep.subr.mxu0 0.0
    %438 = vmatpush1.msra.mxu0 0.0
    %439 = vmatprep.subr.mxu0 0.0
    %440 = vmatpush1.msra.mxu0 0.0
    %441 = vmatprep.subr.mxu0 0.0
    %442 = vmatpush1.msra.mxu0 0.0
    %443 = vmatprep.subr.mxu0 0.0
    %444 = vmatpush1.msra.mxu0 0.0
    %445 = vmatprep.subr.mxu0 0.0
    %446 = vmatpush1.msra.mxu0 0.0
    %447 = vmatprep.subr.mxu0 0.0
    %448 = vmatpush1.msra.mxu0 0.0
    %449 = vmatprep.subr.mxu0 0.0
    %450 = vmatpush1.msra.mxu0 0.0
    %451 = vmatprep.mubr.f32.mxu0 0.0
    %452 = vmatmul.mubr.f32.gmra.mrb[0].mxu0 %v296
    %v453 = vpop.f32.mrb[0].mxu0
    %v454 = vadd.f32 %v280, %v453
    %v455 = vpop.f32.mrb[0].mxu0
    %v456 = vadd.f32 %v282, %v455
    %457 = vmatprep.mubr.f32.mxu0 0.0
    %458 = vmatmul.mubr.f32.gmra.mrb[0].mxu0 %v299
    %v459 = vpop.f32.mrb[0].mxu0
    %v460 = vadd.f32 %v286, %v459
    %v461 = vpop.f32.mrb[0].mxu0
    %v462 = vadd.f32 %v288, %v461
    %463 = vdwg.mxu0
    %v464 = vld [vmem:[%s5] sm:$0xf]
    %v466 = vlaneseq
    %v467 = vshrl.u32 %v466, 7
    %v468 = vsub.s32 0, %v467
    %v469 = vrot.slane %v464, %v468
    %v470 = vlaneseq
    %v471 = vshrl.u32 %v470, 7
    %v472 = vsub.s32 1, %v471
    %v473 = vrot.slane %v464, %v472
    %v474 = vlaneseq
    %v475 = vshrl.u32 %v474, 7
    %v476 = vsub.s32 2, %v475
    %v477 = vrot.slane %v464, %v476
    %v478 = vlaneseq
    %v479 = vshrl.u32 %v478, 7
    %v480 = vsub.s32 3, %v479
    %v481 = vrot.slane %v464, %v480
    %v486 = vadd.f32 %v377, %v469
    %v487 = vadd.f32 %v379, %v473
    %v488 = vadd.f32 %v454, %v477
    %v489 = vadd.f32 %v456, %v481
    %v490 = vadd.f32 %v383, %v469
    %v491 = vadd.f32 %v385, %v473
    %v492 = vadd.f32 %v460, %v477
    %v493 = vadd.f32 %v462, %v481
    %v494 = vld [vmem:[#allocation2] sm:$0xff]
    %v495 = vld [vmem:[#allocation2 + $0x8] sm:$0xff]
    %v496 = vxor.u32 %v488, 2147483648
    %v497 = vxor.u32 %v492, 2147483648
    %v498 = vmul.f32 %v496, 1.442695
    %v499 = vpow.pop %v498
    %v500 = vmul.f32 %v497, 1.442695
    %v501 = vpow.pop %v500
    %v502 = vadd.f32 %v499, 1.0
    %v503 = vadd.f32 %v501, 1.0
    %v504 = vrcp.pop %v502
    %v505 = vmul.f32 1.0, %v504
    %v506 = vrcp.pop %v503
    %v507 = vmul.f32 1.0, %v506
    %v508 = vmul.f32 %v494, %v505
    %v509 = vmul.f32 %v495, %v507
    %v510 = vxor.u32 %v486, 2147483648
    %v511 = vxor.u32 %v490, 2147483648
    %v512 = vmul.f32 %v510, 1.442695
    %v513 = vpow.pop %v512
    %v514 = vmul.f32 %v511, 1.442695
    %v515 = vpow.pop %v514
    %v516 = vadd.f32 %v513, 1.0
    %v517 = vadd.f32 %v515, 1.0
    %v518 = vrcp.pop %v516
    %v519 = vmul.f32 1.0, %v518
    %v520 = vrcp.pop %v517
    %v521 = vmul.f32 1.0, %v520
    %v522 = vtanh.pop %v487
    %v523 = vtanh.pop %v491
    %v524 = vmul.f32 %v519, %v522
    %v525 = vmul.f32 %v521, %v523
    %v526 = vadd.f32 %v508, %v524
    %v527 = vadd.f32 %v509, %v525
    %v528 = vtanh.pop %v526
    %v529 = vtanh.pop %v527
    %v530 = vxor.u32 %v489, 2147483648
    %v531 = vxor.u32 %v493, 2147483648
    %v532 = vmul.f32 %v530, 1.442695
    %v533 = vpow.pop %v532
    %v534 = vmul.f32 %v531, 1.442695
    %v535 = vpow.pop %v534
    %v536 = vadd.f32 %v533, 1.0
    %v537 = vadd.f32 %v535, 1.0
    %v538 = vrcp.pop %v536
    %v539 = vmul.f32 1.0, %v538
    %v540 = vrcp.pop %v537
    %v541 = vmul.f32 1.0, %v540
    %v542 = vmul.f32 %v528, %v539
    %v543 = vmul.f32 %v529, %v541
    %544 = vst [vmem:[#allocation9] sm:$0xff] %v526
    %545 = vst [vmem:[#allocation9 + $0x8] sm:$0xff] %v527
    %546 = vst [vmem:[#allocation8] sm:$0xff] %v542
    %547 = vst [vmem:[#allocation8 + $0x8] sm:$0xff] %v543
    // Predicated region
    $region38: #{tpu_custom_call.1} parent=1 // pred_check
      _
    $region39: #{tpu_custom_call.1} parent=1 // pred_check_branch
      %549 = sbr.rel (0) target = $region41
    $region40: #{tpu_custom_call.1} parent=1 // pred_region
      %s551 = ssub.s32 256, 256
      %552 = vsyncadd [#allocation4], %s551
      %s553 = sshll.u32 [#allocation8], 4
      %s554 = int_to_ptr.vmem [resolvable:$true] %s553
      %559 = dma.vmem_to_hbm [thread:$0]  %s554, 256, %s6, [#allocation4], 128, 128, 8
    $region41: #{tpu_custom_call.1} parent=1 // pred_fallthru
      _
    // Predicated region
    $region42: #{tpu_custom_call.1} parent=1 // pred_check
      _
    $region43: #{tpu_custom_call.1} parent=1 // pred_check_branch
      %561 = sbr.rel (0) target = $region45
    $region44: #{tpu_custom_call.1} parent=1 // pred_region
      %s563 = ssub.s32 256, 256
      %564 = vsyncadd [#allocation10], %s563
      %s565 = sshll.u32 [#allocation9], 4
      %s566 = int_to_ptr.vmem [resolvable:$true] %s565
      %571 = dma.vmem_to_hbm [thread:$0]  %s566, 256, %s7, [#allocation10], 128, 128, 8
    $region45: #{tpu_custom_call.1} parent=1 // pred_fallthru
      _
    // Predicated region
    $region46: #{tpu_custom_call.1} parent=1 // pred_check
      _
    $region47: #{tpu_custom_call.1} parent=1 // pred_check_branch
      %573 = sbr.rel (0) target = $region49
    $region48: #{tpu_custom_call.1} parent=1 // pred_region
      %574 = dma.done [#allocation4], 256
    $region49: #{tpu_custom_call.1} parent=1 // pred_fallthru
      _
    // Predicated region
    $region50: #{tpu_custom_call.1} parent=1 // pred_check
      _
    $region51: #{tpu_custom_call.1} parent=1 // pred_check_branch
      %576 = sbr.rel (0) target = $region53
    $region52: #{tpu_custom_call.1} parent=1 // pred_region
      %577 = dma.done [#allocation10], 256
    $region53: #{tpu_custom_call.1} parent=1 // pred_fallthru
      _
    %578 = vsyncpa [#allocation3], 1
    %579 = vsyncpa [#allocation6], 1
    %580 = vsyncpa [#allocation4], 1
    %581 = vsyncpa [#allocation10], 1

</llo_original>
